<compile_context>
chip_gen: v6e
topology: v6e:2x2x1
jax: 0.10.0
libtpu: 0.0.40
codegen_flags: <defaults>
</compile_context>

<pallas_src>
import functools
import math

import jax
import jax.numpy as jnp
from jax.experimental import pallas as pl
from jax.experimental.pallas import tpu as pltpu


_SQRT_HALF = 1.0 / math.sqrt(2.0)


def _gelu_exact(x):
    # nn.GELU() default ("exact") = 0.5 * x * (1 + erf(x / sqrt(2)))
    return 0.5 * x * (1.0 + jax.lax.erf(x * _SQRT_HALF))


def _gelu_tanh(x):
    # tanh approximation; transcendental goes to the EUP slot.
    return jax.nn.gelu(x, approximate=True)


def _mlp_kernel_resident(x_ref, w1_ref, b1_ref, w2_ref, b2_ref, o_ref, *, gelu):
    # Whole MLP for one row tile; weights stay resident for the entire kernel.
    h = jnp.dot(x_ref[...], w1_ref[...], preferred_element_type=jnp.float32)
    h = gelu(h + b1_ref[...].astype(jnp.float32))
    o = jnp.dot(h.astype(w2_ref.dtype), w2_ref[...],
                preferred_element_type=jnp.float32)
    o_ref[...] = (o + b2_ref[...].astype(jnp.float32)).astype(o_ref.dtype)


def _mlp_kernel_streamed(x_ref, w1_ref, b1_ref, w2_ref, b2_ref, o_ref, acc_ref,
                         *, gelu):
    # Hidden dim streamed in chunks; (tm, D) f32 accumulator across k.
    k = pl.program_id(1)

    @pl.when(k == 0)
    def _():
        acc_ref[...] = jnp.zeros_like(acc_ref)

    h = jnp.dot(x_ref[...], w1_ref[...], preferred_element_type=jnp.float32)
    h = gelu(h + b1_ref[...].astype(jnp.float32))
    acc_ref[...] += jnp.dot(h.astype(w2_ref.dtype), w2_ref[...],
                            preferred_element_type=jnp.float32)

    @pl.when(k == pl.num_programs(1) - 1)
    def _():
        o_ref[...] = (acc_ref[...] + b2_ref[...].astype(jnp.float32)).astype(
            o_ref.dtype)


def _nbytes(shape, dtype):
    return math.prod(shape) * jnp.dtype(dtype).itemsize


def _round_up(a, b):
    return -(-a // b) * b


def _vmem_budget_bytes():
    cap = 64 << 20  # conservative default (v7x physical VMEM)
    try:
        info = pltpu.get_tpu_info()
        c = getattr(info, "vmem_capacity_bytes", None)
        if c:
            cap = int(c)
    except Exception:
        pass
    # Leave headroom for compiler-internal scratch, semaphores, output DB.
    return max(cap - (16 << 20), 16 << 20)


def mlp_pallas(x, w1, b1, w2, b2, *, row_tile=1024, hidden_tile=512,
               compute_dtype=None, approximate_gelu=False,
               weights_resident=None):
    """x: (B, T, D); w1: (D, H); b1: (H,); w2: (H, D); b2: (D,).

    compute_dtype: optionally cast activations/weights (e.g. jnp.bfloat16) for
    the MXU passes; accumulation is always f32 and the output keeps x.dtype.
    weights_resident: None = auto (resident if it fits VMEM), True/False force.
    approximate_gelu: False = exact erf (nn.GELU() default), True = tanh.
    """
    B, T, D = x.shape
    H = w1.shape[1]
    out_dtype = x.dtype

    if compute_dtype is not None:
        x = x.astype(compute_dtype)
        w1 = w1.astype(compute_dtype)
        w2 = w2.astype(compute_dtype)

    N = B * T
    x2d = x.reshape(N, D)

    # --- Row tile: adaptive, sublane-aligned, >=2 tiles when N allows. ------
    sub = 8 * max(1, 4 // jnp.dtype(x2d.dtype).itemsize)  # f32:8 bf16:16 int8:32
    if N > row_tile:
        tm = row_tile
    else:
        tm = min(row_tile, _round_up(N, 256))  # cap padding waste
        if tm >= N:
            # Split small N into two sublane-aligned row tiles (v7x megacore),
            # unless N already fits in one packed sublane group.
            tm = _round_up(-(-N // 2), sub) if N > sub else sub
    tm = max(_round_up(tm, sub), sub)

    tm_candidates = [tm]
    t = tm
    while t > 256:
        t = max(256, t // 2)
        t = max(_round_up(t, sub), sub)
        tm_candidates.append(t)

    # --- Hidden dim: weights resident if they fit the budget, else streamed. -
    budget = _vmem_budget_bytes()
    Hp_full = _round_up(H, 128)

    def need_resident(tm_):
        return int(1.15 * (
            2 * _nbytes((tm_, D), x2d.dtype)
            + 2 * _nbytes((tm_, D), out_dtype)
            + 2 * _nbytes((D, Hp_full), w1.dtype)
            + 2 * _nbytes((Hp_full, D), w2.dtype)
            + 2 * _nbytes((1, Hp_full), b1.dtype)
            + 2 * _nbytes((1, D), b2.dtype)
            + _nbytes((tm_, Hp_full), jnp.float32)    # live intermediate h
            + _nbytes((tm_, Hp_full), w2.dtype)))     # h cast for 2nd matmul

    def need_streamed(tm_, th_):
        return int(1.15 * (
            2 * _nbytes((tm_, D), x2d.dtype)
            + 2 * _nbytes((tm_, D), out_dtype)
            + 2 * _nbytes((D, th_), w1.dtype)
            + 2 * _nbytes((th_, D), w2.dtype)
            + 2 * _nbytes((1, th_), b1.dtype)
            + 2 * _nbytes((1, D), b2.dtype)
            + _nbytes((tm_, D), jnp.float32)          # accumulator scratch
            + _nbytes((tm_, th_), jnp.float32)        # live intermediate h
            + _nbytes((tm_, th_), w2.dtype)))         # h cast

    chosen = None
    if weights_resident is not False:
        for tm_c in tm_candidates:
            if need_resident(tm_c) <= budget:
                chosen = ("resident", tm_c, Hp_full)
                break
        if chosen is None and weights_resident is True:
            chosen = ("resident", tm_candidates[-1], Hp_full)
    if chosen is None:
        th_candidates = []
        for cand in (max(128, _round_up(hidden_tile, 128)),
                     2048, 1024, 512, 256, 128):
            cand = min(cand, Hp_full)
            if cand not in th_candidates:
                th_candidates.append(cand)
        th_candidates.sort(reverse=True)
        for tm_c in tm_candidates:
            for th_c in th_candidates:
                if need_streamed(tm_c, th_c) <= budget:
                    chosen = ("streamed", tm_c, th_c)
                    break
            if chosen is not None:
                break
        if chosen is None:  # last resort: smallest config, let the compiler try
            chosen = ("streamed", tm_candidates[-1], th_candidates[-1])

    mode, tm, th = chosen
    Np = _round_up(N, tm)
    num_row_tiles = Np // tm
    Hp = Hp_full if mode == "resident" else _round_up(H, th)

    # --- Pad rows of x and the hidden dim of the weights.  Zero-padding the
    # hidden dim is exact: gelu(0) == 0, so padded cols/rows contribute 0. ---
    if Np > N:
        x2d = jnp.pad(x2d, ((0, Np - N), (0, 0)))
    b1_2d = b1.reshape(1, H)
    b2_2d = b2.reshape(1, D)
    if Hp > H:
        w1 = jnp.pad(w1, ((0, 0), (0, Hp - H)))
        b1_2d = jnp.pad(b1_2d, ((0, 0), (0, Hp - H)))
        w2 = jnp.pad(w2, ((0, Hp - H), (0, 0)))

    gelu = _gelu_tanh if approximate_gelu else _gelu_exact

    weight_bytes = (_nbytes((D, Hp), w1.dtype) + _nbytes((Hp, D), w2.dtype)
                    + _nbytes((1, Hp), b1_2d.dtype) + _nbytes((1, D), b2_2d.dtype))
    weight_reads = 1 if mode == "resident" else num_row_tiles
    cost = pl.CostEstimate(
        flops=4 * N * D * H,                    # two matmuls
        transcendentals=N * H,                  # erf/tanh over hidden acts
        bytes_accessed=(_nbytes((Np, D), x2d.dtype)
                        + _nbytes((Np, D), out_dtype)
                        + weight_reads * weight_bytes),
    )

    if mode == "resident":
        kernel = functools.partial(_mlp_kernel_resident, gelu=gelu)
        grid = (num_row_tiles,)
        in_specs = [
            pl.BlockSpec((tm, D), lambda i: (i, 0)),     # x row tile
            pl.BlockSpec((D, Hp), lambda i: (0, 0)),     # W1 (resident)
            pl.BlockSpec((1, Hp), lambda i: (0, 0)),     # b1 (resident)
            pl.BlockSpec((Hp, D), lambda i: (0, 0)),     # W2 (resident)
            pl.BlockSpec((1, D), lambda i: (0, 0)),      # b2 (resident)
        ]
        out_specs = pl.BlockSpec((tm, D), lambda i: (i, 0))
        scratch_shapes = []
        dim_sem = ("parallel",)
    else:
        kernel = functools.partial(_mlp_kernel_streamed, gelu=gelu)
        grid = (num_row_tiles, Hp // th)
        in_specs = [
            pl.BlockSpec((tm, D), lambda i, k: (i, 0)),  # x row tile
            pl.BlockSpec((D, th), lambda i, k: (0, k)),  # W1 column block
            pl.BlockSpec((1, th), lambda i, k: (0, k)),  # b1 chunk
            pl.BlockSpec((th, D), lambda i, k: (k, 0)),  # W2 row block
            pl.BlockSpec((1, D), lambda i, k: (0, 0)),   # b2 (constant)
        ]
        out_specs = pl.BlockSpec((tm, D), lambda i, k: (i, 0))
        scratch_shapes = [pltpu.VMEM((tm, D), jnp.float32)]
        dim_sem = ("parallel", "arbitrary")

    out2d = pl.pallas_call(
        kernel,
        out_shape=jax.ShapeDtypeStruct((Np, D), out_dtype),
        grid_spec=pltpu.PrefetchScalarGridSpec(
            num_scalar_prefetch=0,
            grid=grid,
            in_specs=in_specs,
            out_specs=out_specs,
            scratch_shapes=scratch_shapes,
        ),
        compiler_params=pltpu.CompilerParams(
            dimension_semantics=dim_sem,
            vmem_limit_bytes=int(budget),
        ),
        cost_estimate=cost,
    )(x2d, w1, b1_2d, w2, b2_2d)

    if Np > N:
        out2d = out2d[:N]
    return out2d.reshape(B, T, D)


def mlp_reference(x, w1, b1, w2, b2, approximate_gelu=False):
    h = jnp.dot(x.astype(jnp.float32), w1.astype(jnp.float32)) + b1
    h = _gelu_tanh(h) if approximate_gelu else _gelu_exact(h)
    o = jnp.dot(h, w2.astype(jnp.float32)) + b2
    return o.astype(x.dtype)


if __name__ == "__main__":
    # Small GPT-2-ish config: d_model=32, ffn_expansion=4, bias=True, dropout=0.
    B, T, D = 2, 8, 32
    H = 4 * D

    key = jax.random.PRNGKey(0)
    kx, k1, kb1, k2, kb2 = jax.random.split(key, 5)

    x = jax.random.normal(kx, (B, T, D), dtype=jnp.float32)
    w1 = jax.random.normal(k1, (D, H), dtype=jnp.float32) * 0.02
    b1 = jax.random.normal(kb1, (H,), dtype=jnp.float32) * 0.02
    # NOTE: the original module zero-inits c_proj (dense_init(..., zero_init=True));
    # small deterministic values are used instead so the numeric check is non-trivial.
    w2 = jax.random.normal(k2, (H, D), dtype=jnp.float32) * 0.02
    b2 = jax.random.normal(kb2, (D,), dtype=jnp.float32) * 0.02
    # TODO(synk): training-mode dropout (stochastic masking) not implemented;
    # eval-mode dropout is the identity.

    ref = mlp_reference(x, w1, b1, w2, b2)

    # 1) Default path: weights-resident, exact-erf GELU, f32, 2 row tiles.
    out = jax.block_until_ready(mlp_pallas(x, w1, b1, w2, b2))
    assert out.shape == (B, T, D)
    assert jnp.allclose(out, ref, atol=1e-4, rtol=1e-4), "resident path mismatch"

    # 2) Forced hidden-dim streaming path (accumulator kernel).
    out_s = jax.block_until_ready(
        mlp_pallas(x, w1, b1, w2, b2, weights_resident=False, hidden_tile=128))
    assert jnp.allclose(out_s, ref, atol=1e-4, rtol=1e-4), "streamed path mismatch"

    # 3) bf16 MXU passes with f32 accumulation; row_tile=8 gets rounded up to
    #    the bf16 sublane packing (16).  Loose tolerance vs the f32 reference.
    out_bf16 = jax.block_until_ready(
        mlp_pallas(x, w1, b1, w2, b2, row_tile=8, compute_dtype=jnp.bfloat16))
    assert jnp.allclose(out_bf16, ref, atol=5e-2, rtol=5e-2), "bf16 path mismatch"

    # 4) Ragged hidden dim (H=96 -> zero-padded to 128), exact + tanh GELU.
    D2, H2 = 32, 96
    kx2, k12, kb12, k22, kb22 = jax.random.split(jax.random.PRNGKey(1), 5)
    x2 = jax.random.normal(kx2, (B, T, D2), dtype=jnp.float32)
    w12 = jax.random.normal(k12, (D2, H2), dtype=jnp.float32) * 0.02
    b12 = jax.random.normal(kb12, (H2,), dtype=jnp.float32) * 0.02
    w22 = jax.random.normal(k22, (H2, D2), dtype=jnp.float32) * 0.02
    b22 = jax.random.normal(kb22, (D2,), dtype=jnp.float32) * 0.02

    out_r = jax.block_until_ready(mlp_pallas(x2, w12, b12, w22, b22))
    ref_r = mlp_reference(x2, w12, b12, w22, b22)
    assert jnp.allclose(out_r, ref_r, atol=1e-4, rtol=1e-4), "ragged-H mismatch"

    out_t = jax.block_until_ready(
        mlp_pallas(x2, w12, b12, w22, b22, approximate_gelu=True))
    ref_t = mlp_reference(x2, w12, b12, w22, b22, approximate_gelu=True)
    assert jnp.allclose(out_t, ref_t, atol=1e-4, rtol=1e-4), "tanh-GELU mismatch"

    print("KERNEL_OK")
</pallas_src>

<mosaic_0001>
module attributes {stable_mosaic.version = 11 : i64} {
  func.func @_mlp_kernel_resident(%arg0: i32, %arg1: memref<8x32xf32, #tpu.memory_space<vmem>>, %arg2: memref<32x128xf32, #tpu.memory_space<vmem>>, %arg3: memref<1x128xf32, #tpu.memory_space<vmem>>, %arg4: memref<128x32xf32, #tpu.memory_space<vmem>>, %arg5: memref<1x32xf32, #tpu.memory_space<vmem>>, %arg6: memref<8x32xf32, #tpu.memory_space<vmem>>) attributes {dimension_semantics = [#tpu.dimension_semantics<parallel>], iteration_bounds = array<i64: 2>, scalar_prefetch = 0 : i64, scratch_operands = 0 : i64, tpu.core_type = #tpu.core_type<tc>, window_params = [{transform_indices = @transform_0, window_bounds = array<i64: 8, 32>}, {pipeline_mode = #tpu.pipeline_mode<synchronous>, transform_indices = @transform_1, window_bounds = array<i64: 32, 128>}, {pipeline_mode = #tpu.pipeline_mode<synchronous>, transform_indices = @transform_2, window_bounds = array<i64: 1, 128>}, {pipeline_mode = #tpu.pipeline_mode<synchronous>, transform_indices = @transform_3, window_bounds = array<i64: 128, 32>}, {pipeline_mode = #tpu.pipeline_mode<synchronous>, transform_indices = @transform_4, window_bounds = array<i64: 1, 32>}, {transform_indices = @transform_5, window_bounds = array<i64: 8, 32>}]} {
    %c0 = arith.constant 0 : index
    %c0_0 = arith.constant 0 : index
    %0 = vector.load %arg1[%c0, %c0_0] : memref<8x32xf32, #tpu.memory_space<vmem>>, vector<8x32xf32>
    %c0_1 = arith.constant 0 : index
    %c0_2 = arith.constant 0 : index
    %1 = vector.load %arg2[%c0_1, %c0_2] : memref<32x128xf32, #tpu.memory_space<vmem>>, vector<32x128xf32>
    %cst = arith.constant dense<0.000000e+00> : vector<8x128xf32>
    %2 = tpu.matmul %0, %1, %cst {dimension_numbers = #tpu.dot_dimension_numbers<[1], [0], [0], [1], [0, 0, 1, 1], [], []>} : vector<8x32xf32>, vector<32x128xf32>, vector<8x128xf32> -> vector<8x128xf32>
    %c0_3 = arith.constant 0 : index
    %c0_4 = arith.constant 0 : index
    %3 = vector.load %arg3[%c0_3, %c0_4] : memref<1x128xf32, #tpu.memory_space<vmem>>, vector<1x128xf32>
    %4 = vector.broadcast %3 : vector<1x128xf32> to vector<8x128xf32>
    %5 = arith.addf %2, %4 : vector<8x128xf32>
    %cst_5 = arith.constant 5.000000e-01 : f32
    %6 = vector.broadcast %cst_5 : f32 to vector<8x128xf32>
    %7 = arith.mulf %6, %5 : vector<8x128xf32>
    %cst_6 = arith.constant 0.707106769 : f32
    %8 = vector.broadcast %cst_6 : f32 to vector<8x128xf32>
    %9 = arith.mulf %5, %8 : vector<8x128xf32>
    %10 = math.erf %9 : vector<8x128xf32>
    %cst_7 = arith.constant 1.000000e+00 : f32
    %11 = vector.broadcast %cst_7 : f32 to vector<8x128xf32>
    %12 = arith.addf %11, %10 : vector<8x128xf32>
    %13 = arith.mulf %7, %12 : vector<8x128xf32>
    %c0_8 = arith.constant 0 : index
    %c0_9 = arith.constant 0 : index
    %14 = vector.load %arg4[%c0_8, %c0_9] : memref<128x32xf32, #tpu.memory_space<vmem>>, vector<128x32xf32>
    %cst_10 = arith.constant dense<0.000000e+00> : vector<8x32xf32>
    %15 = tpu.matmul %13, %14, %cst_10 {dimension_numbers = #tpu.dot_dimension_numbers<[1], [0], [0], [1], [0, 0, 1, 1], [], []>} : vector<8x128xf32>, vector<128x32xf32>, vector<8x32xf32> -> vector<8x32xf32>
    %c0_11 = arith.constant 0 : index
    %c0_12 = arith.constant 0 : index
    %16 = vector.load %arg5[%c0_11, %c0_12] : memref<1x32xf32, #tpu.memory_space<vmem>>, vector<1x32xf32>
    %17 = vector.broadcast %16 : vector<1x32xf32> to vector<8x32xf32>
    %18 = arith.addf %15, %17 : vector<8x32xf32>
    %c0_13 = arith.constant 0 : index
    %c0_14 = arith.constant 0 : index
    %19 = vector.load %arg6[%c0_13, %c0_14] : memref<8x32xf32, #tpu.memory_space<vmem>>, vector<8x32xf32>
    tpu.vector_store %arg6[%c0_13, %c0_14], %18 {strides = array<i32>} : memref<8x32xf32, #tpu.memory_space<vmem>>, vector<8x32xf32>,
    return
  }
  func.func @transform_0(%arg0: i32) -> (i32, i32) {
    %c0_i32 = arith.constant 0 : i32
    %c0_i32_0 = arith.constant 0 : i32
    return %arg0, %c0_i32 : i32, i32
  }
  func.func @transform_1(%arg0: i32) -> (i32, i32) {
    %c0_i32 = arith.constant 0 : i32
    %c0_i32_0 = arith.constant 0 : i32
    %c0_i32_1 = arith.constant 0 : i32
    return %c0_i32, %c0_i32_0 : i32, i32
  }
  func.func @transform_2(%arg0: i32) -> (i32, i32) {
    %c0_i32 = arith.constant 0 : i32
    %c0_i32_0 = arith.constant 0 : i32
    %c0_i32_1 = arith.constant 0 : i32
    return %c0_i32, %c0_i32_0 : i32, i32
  }
  func.func @transform_3(%arg0: i32) -> (i32, i32) {
    %c0_i32 = arith.constant 0 : i32
    %c0_i32_0 = arith.constant 0 : i32
    %c0_i32_1 = arith.constant 0 : i32
    return %c0_i32, %c0_i32_0 : i32, i32
  }
  func.func @transform_4(%arg0: i32) -> (i32, i32) {
    %c0_i32 = arith.constant 0 : i32
    %c0_i32_0 = arith.constant 0 : i32
    %c0_i32_1 = arith.constant 0 : i32
    return %c0_i32, %c0_i32_0 : i32, i32
  }
  func.func @transform_5(%arg0: i32) -> (i32, i32) {
    %c0_i32 = arith.constant 0 : i32
    %c0_i32_0 = arith.constant 0 : i32
    return %arg0, %c0_i32 : i32, i32
  }
}

</mosaic_0001>

<llo_original>
// kernel: tpu_custom_call.1
$region0: #{tpu_custom_call.1}
  #allocation0 [shape = 'u32[]', space=smem, size = 0x4, offset = 0x4, fixed_abs, tag = 'smem constant byte address 0x4 - core index']
  #allocation1 [shape = 'u32[144,128]{1,0:T(1,128)}', space=vmem, size = 0x12000, scoped, tag = 'internal scratch']
  %s0 = inlined_call_operand.vmem [shape: f32[16,32], index: 0, kind: input, shape index: {}]
  %s1 = inlined_call_operand.vmem [shape: f32[32,128], index: 1, kind: input, shape index: {}]
  %s2 = inlined_call_operand.vmem [shape: f32[1,128], index: 2, kind: input, shape index: {}]
  %s3 = inlined_call_operand.vmem [shape: f32[128,32], index: 3, kind: input, shape index: {}]
  %s4 = inlined_call_operand.vmem [shape: f32[1,32], index: 4, kind: input, shape index: {}]
  %s5 = inlined_call_operand.hbm [shape: f32[16,32], index: 5, kind: output, shape index: {}]
  %s6 = sld [smem:[#allocation0]]
  $region53: #{tpu_custom_call.1} parent=0
    _
  %s8 = ssub.s32 1, %s6
  %s9 = scalar_select 0, %s8, %s6
  $region1: #{tpu_custom_call.1} parent=0
    #allocation2 [shape = 'u8[8192]{0}', space=vmem, size = 0x2000, scoped, tag = 'output window, operand 0']
    #allocation3 [shape = 's32[2]{0}', space=sflag, size = 0x8, scoped, tag = 'scoped memory for tpu_custom_call.1']
    %10 = vsyncpa [#allocation3], 0
    %s11 = scalar_lea.sflag [#allocation3], 1
    %12 = vsyncpa %s11, 0
    loop: start=0, step=1, limit=4
    $region2: #{tpu_custom_call.1} parent=1 // loop_pre_header
      _
    $region3: #{tpu_custom_call.1} parent=1 // loop_header
      %s14 = sphi 0, %s18
      %p15 = scmp.ge.s32.totalorder %s14, 4
      %s24 = sphi 0, %s26
      %s27 = sphi 0, %s24
      %s28 = sphi 0, %s27
      %s44 = sphi 0, %s28
      %s48 = sphi 0, %s48
      %s50 = sphi 0, %s48
      %s51 = sphi 0, %s50
      %s65 = sphi 0, %s51
      %s69 = sphi 0, %s69
      %s71 = sphi 0, %s69
      %s72 = sphi 0, %s71
      %s86 = sphi 0, %s72
      %s90 = sphi 0, %s90
      %s92 = sphi 0, %s90
      %s93 = sphi 0, %s92
      %s107 = sphi 0, %s93
      %s111 = sphi 0, %s111
      %s113 = sphi 0, %s111
      %s114 = sphi 0, %s113
      %s128 = sphi 0, %s114
      %s134 = sphi 0, %s136
      %s137 = sphi 0, %s134
      %s138 = sphi 0, %s137
      %s154 = sphi 0, %s138
    $region4: #{tpu_custom_call.1} parent=1 // loop_header_branch
      %17 = sbr.rel (%p15) target = $region8
    $region5: #{tpu_custom_call.1} parent=1 // loop_body
      %s19 = ssub.s32 %s14, 1
      %s20 = ssub.s32 %s14, 2
      %s21 = sadd.s32 %s14, 1
      %s22 = ssub.s32 %s14, %s21
      %p23 = scmp.eq.s32.totalorder %s22, 0
      %s25 = sadd.s32 %s24, 1
      %s26 = scalar_select %p23, %s24, %s25
      %p29 = pneg %p23
      %p30 = scmp.eq.s32.totalorder %s14, 1
      %p31 = por %p29, %p30
      %p32 = scmp.ne.s32.totalorder %s24, %s27
      %p33 = scmp.eq.s32.totalorder %s14, 0
      %p34 = por %p32, %p33
      %p35 = scmp.ne.s32.totalorder %s24, %s27
      %p36 = scmp.eq.s32.totalorder %s19, 1
      %p37 = por %p35, %p36
      %p38 = scmp.ne.s32.totalorder %s27, %s28
      %p39 = scmp.eq.s32.totalorder %s19, 0
      %p40 = por %p38, %p39
      %p41 = scmp.ne.s32.totalorder %s27, %s28
      %p42 = scmp.eq.s32.totalorder %s20, 1
      %p43 = por %p41, %p42
      %p45 = scmp.ne.s32.totalorder %s28, %s44
      %p46 = scmp.eq.s32.totalorder %s20, 0
      %p47 = por %p45, %p46
      %s49 = sadd.s32 %s48, 1
      %p52 = scmp.eq.s32.totalorder %s14, 1
      %p53 = scmp.ne.s32.totalorder %s48, %s50
      %p54 = scmp.eq.s32.totalorder %s14, 0
      %p55 = por %p53, %p54
      %p56 = scmp.ne.s32.totalorder %s48, %s50
      %p57 = scmp.eq.s32.totalorder %s19, 1
      %p58 = por %p56, %p57
      %p59 = scmp.ne.s32.totalorder %s50, %s51
      %p60 = scmp.eq.s32.totalorder %s19, 0
      %p61 = por %p59, %p60
      %p62 = scmp.ne.s32.totalorder %s50, %s51
      %p63 = scmp.eq.s32.totalorder %s20, 1
      %p64 = por %p62, %p63
      %p66 = scmp.ne.s32.totalorder %s51, %s65
      %p67 = scmp.eq.s32.totalorder %s20, 0
      %p68 = por %p66, %p67
      %s70 = sadd.s32 %s69, 1
      %p73 = scmp.eq.s32.totalorder %s14, 1
      %p74 = scmp.ne.s32.totalorder %s69, %s71
      %p75 = scmp.eq.s32.totalorder %s14, 0
      %p76 = por %p74, %p75
      %p77 = scmp.ne.s32.totalorder %s69, %s71
      %p78 = scmp.eq.s32.totalorder %s19, 1
      %p79 = por %p77, %p78
      %p80 = scmp.ne.s32.totalorder %s71, %s72
      %p81 = scmp.eq.s32.totalorder %s19, 0
      %p82 = por %p80, %p81
      %p83 = scmp.ne.s32.totalorder %s71, %s72
      %p84 = scmp.eq.s32.totalorder %s20, 1
      %p85 = por %p83, %p84
      %p87 = scmp.ne.s32.totalorder %s72, %s86
      %p88 = scmp.eq.s32.totalorder %s20, 0
      %p89 = por %p87, %p88
      %s91 = sadd.s32 %s90, 1
      %p94 = scmp.eq.s32.totalorder %s14, 1
      %p95 = scmp.ne.s32.totalorder %s90, %s92
      %p96 = scmp.eq.s32.totalorder %s14, 0
      %p97 = por %p95, %p96
      %p98 = scmp.ne.s32.totalorder %s90, %s92
      %p99 = scmp.eq.s32.totalorder %s19, 1
      %p100 = por %p98, %p99
      %p101 = scmp.ne.s32.totalorder %s92, %s93
      %p102 = scmp.eq.s32.totalorder %s19, 0
      %p103 = por %p101, %p102
      %p104 = scmp.ne.s32.totalorder %s92, %s93
      %p105 = scmp.eq.s32.totalorder %s20, 1
      %p106 = por %p104, %p105
      %p108 = scmp.ne.s32.totalorder %s93, %s107
      %p109 = scmp.eq.s32.totalorder %s20, 0
      %p110 = por %p108, %p109
      %s112 = sadd.s32 %s111, 1
      %p115 = scmp.eq.s32.totalorder %s14, 1
      %p116 = scmp.ne.s32.totalorder %s111, %s113
      %p117 = scmp.eq.s32.totalorder %s14, 0
      %p118 = por %p116, %p117
      %p119 = scmp.ne.s32.totalorder %s111, %s113
      %p120 = scmp.eq.s32.totalorder %s19, 1
      %p121 = por %p119, %p120
      %p122 = scmp.ne.s32.totalorder %s113, %s114
      %p123 = scmp.eq.s32.totalorder %s19, 0
      %p124 = por %p122, %p123
      %p125 = scmp.ne.s32.totalorder %s113, %s114
      %p126 = scmp.eq.s32.totalorder %s20, 1
      %p127 = por %p125, %p126
      %p129 = scmp.ne.s32.totalorder %s114, %s128
      %p130 = scmp.eq.s32.totalorder %s20, 0
      %p131 = por %p129, %p130
      %s132 = ssub.s32 %s14, %s21
      %p133 = scmp.eq.s32.totalorder %s132, 0
      %s135 = sadd.s32 %s134, 1
      %s136 = scalar_select %p133, %s134, %s135
      %p139 = pneg %p133
      %p140 = scmp.eq.s32.totalorder %s14, 1
      %p141 = por %p139, %p140
      %p142 = scmp.ne.s32.totalorder %s134, %s137
      %p143 = scmp.eq.s32.totalorder %s14, 0
      %p144 = por %p142, %p143
      %p145 = scmp.ne.s32.totalorder %s134, %s137
      %p146 = scmp.eq.s32.totalorder %s19, 1
      %p147 = por %p145, %p146
      %p148 = scmp.ne.s32.totalorder %s137, %s138
      %p149 = scmp.eq.s32.totalorder %s19, 0
      %p150 = por %p148, %p149
      %p151 = scmp.ne.s32.totalorder %s137, %s138
      %p152 = scmp.eq.s32.totalorder %s20, 1
      %p153 = por %p151, %p152
      %p155 = scmp.ne.s32.totalorder %s138, %s154
      %p156 = scmp.eq.s32.totalorder %s20, 0
      %p157 = por %p155, %p156
      %p158 = scmp.le.s32.totalorder 1, %s14
      %p159 = scmp.lt.s32.totalorder %s14, 3
      %p160 = pnand %p158, %p159
      %p161 = pneg %p160
      // Predicated region
      $region9: #{tpu_custom_call.1} parent=5 // pred_check
        _
      $region10: #{tpu_custom_call.1} parent=5 // pred_check_branch
        %163 = sbr.rel (%p160) target = $region12
      $region11: #{tpu_custom_call.1} parent=5 // pred_region
        %s164 = ssub.s32 %s14, 1
        // Predicated region
        $region13: #{tpu_custom_call.1} parent=11 // pred_check
          %p165 = pneg %p61
        $region14: #{tpu_custom_call.1} parent=11 // pred_check_branch
          %167 = sbr.rel (%p165) target = $region16
        $region15: #{tpu_custom_call.1} parent=11 // pred_region
          _
        $region16: #{tpu_custom_call.1} parent=11 // pred_fallthru
          _
        // Predicated region
        $region17: #{tpu_custom_call.1} parent=11 // pred_check
          %p168 = pneg %p82
        $region18: #{tpu_custom_call.1} parent=11 // pred_check_branch
          %170 = sbr.rel (%p168) target = $region20
        $region19: #{tpu_custom_call.1} parent=11 // pred_region
          _
        $region20: #{tpu_custom_call.1} parent=11 // pred_fallthru
          _
        // Predicated region
        $region21: #{tpu_custom_call.1} parent=11 // pred_check
          %p171 = pneg %p103
        $region22: #{tpu_custom_call.1} parent=11 // pred_check_branch
          %173 = sbr.rel (%p171) target = $region24
        $region23: #{tpu_custom_call.1} parent=11 // pred_region
          _
        $region24: #{tpu_custom_call.1} parent=11 // pred_fallthru
          _
        // Predicated region
        $region25: #{tpu_custom_call.1} parent=11 // pred_check
          %p174 = pneg %p124
        $region26: #{tpu_custom_call.1} parent=11 // pred_check_branch
          %176 = sbr.rel (%p174) target = $region28
        $region27: #{tpu_custom_call.1} parent=11 // pred_region
          _
        $region28: #{tpu_custom_call.1} parent=11 // pred_fallthru
          _
      $region12: #{tpu_custom_call.1} parent=5 // pred_fallthru
        _
      %p177 = scmp.lt.s32.totalorder %s14, 2
      // Predicated region
      $region29: #{tpu_custom_call.1} parent=5 // pred_check
        %p178 = pneg %p177
      $region30: #{tpu_custom_call.1} parent=5 // pred_check_branch
        %180 = sbr.rel (%p178) target = $region32
      $region31: #{tpu_custom_call.1} parent=5 // pred_region
        // Predicated region
        $region33: #{tpu_custom_call.1} parent=31 // pred_check
          %p181 = pneg %p34
        $region34: #{tpu_custom_call.1} parent=31 // pred_check_branch
          %183 = sbr.rel (%p181) target = $region36
        $region35: #{tpu_custom_call.1} parent=31 // pred_region
          %p184 = scmp.lt.s32.totalorder %s14, 1
          %s185 = scalar_select %p184, %s14, 1
          %s186 = smul.addr %s185, 8
          %s187 = scalar_lea.vmem %s0, %s186
        $region36: #{tpu_custom_call.1} parent=31 // pred_fallthru
          _
      $region32: #{tpu_custom_call.1} parent=5 // pred_fallthru
        _
      %p188 = scmp.le.s32.totalorder 1, %s14
      %p189 = scmp.lt.s32.totalorder %s14, 3
      %p190 = pnand %p188, %p189
      %p191 = pneg %p190
      // Predicated region
      $region37: #{tpu_custom_call.1} parent=5 // pred_check
        _
      $region38: #{tpu_custom_call.1} parent=5 // pred_check_branch
        %193 = sbr.rel (%p190) target = $region40
      $region39: #{tpu_custom_call.1} parent=5 // pred_region
        %s194 = ssub.s32 %s14, 1
        %p195 = scmp.lt.s32.totalorder %s19, 1
        %s196 = scalar_select %p195, %s19, 1
        %s197 = smul.addr %s196, 8
        %s198 = scalar_lea.vmem %s0, %s197
        %p199 = pneg %p40
        %p200 = pneg %p37
        %p201 = pneg %p61
        %p202 = pneg %p58
        %p203 = pneg %p82
        %p204 = pneg %p79
        %p205 = pneg %p103
        %p206 = pneg %p100
        %p207 = pneg %p124
        %p208 = pneg %p121
        %p209 = pneg %p150
        %p210 = pneg %p147
        %s211 = sand.u32 %s137, 1
        %s212 = scalar_lea.sflag [#allocation3], %s211
        %s213 = sand.u32 %s137, 1
        %s214 = smul.addr %s213, 8
        %s215 = scalar_lea.vmem [#allocation2], %s214
        %p216 = scmp.lt.s32.totalorder %s19, 1
        %s217 = scalar_select %p216, %s19, 1
        %s218 = smul.addr %s217, 8
        %s219 = scalar_lea.vmem %s0, %s218
        %v220 = vld [vmem:[%s219] sm:$0xff]
        %v221 = vld [vmem:[%s1] sm:$0xff]
        %v222 = vld [vmem:[%s1 + $0x8] sm:$0xff]
        %v223 = vld [vmem:[%s1 + $0x10] sm:$0xff]
        %v224 = vld [vmem:[%s1 + $0x18] sm:$0xff]
        %v225 = vld [vmem:[%s2] sm:$0x1]
        %v227 = vlaneseq
        %v228 = vshrl.u32 %v227, 7
        %v229 = vsub.s32 0, %v228
        %v230 = vrot.slane %v225, %v229
        %vm232 = vcmask 261120
        %v234 = vsel %vm232, %v220, 0
        %236 = vmatprep.subr.mxu0 0.0
        %237 = vmatpush1.msra.mxu0 0.0
        %238 = vmatprep.subr.mxu0 0.0
        %239 = vmatpush1.msra.mxu0 0.0
        %240 = vmatprep.subr.mxu0 0.0
        %241 = vmatpush1.msra.mxu0 0.0
        %242 = vmatprep.subr.mxu0 0.0
        %243 = vmatpush1.msra.mxu0 0.0
        %244 = vmatprep.subr.mxu0 0.0
        %245 = vmatpush1.msra.mxu0 0.0
        %246 = vmatprep.subr.mxu0 0.0
        %247 = vmatpush1.msra.mxu0 0.0
        %248 = vmatprep.subr.mxu0 0.0
        %249 = vmatpush1.msra.mxu0 0.0
        %250 = vmatprep.subr.mxu0 0.0
        %251 = vmatpush1.msra.mxu0 0.0
        %252 = vmatprep.subr.mxu0 0.0
        %253 = vmatpush1.msra.mxu0 0.0
        %254 = vmatprep.subr.mxu0 0.0
        %255 = vmatpush1.msra.mxu0 0.0
        %256 = vmatprep.subr.mxu0 0.0
        %257 = vmatpush1.msra.mxu0 0.0
        %258 = vmatprep.subr.mxu0 0.0
        %259 = vmatpush1.msra.mxu0 0.0
        %260 = vmatprep.subr.mxu0 0.0
        %261 = vmatpush1.msra.mxu0 %v224
        %262 = vmatprep.subr.mxu0 0.0
        %263 = vmatpush1.msra.mxu0 %v223
        %264 = vmatprep.subr.mxu0 0.0
        %265 = vmatpush1.msra.mxu0 %v222
        %266 = vmatprep.subr.mxu0 0.0
        %267 = vmatpush1.msra.mxu0 %v221
        %268 = vmatprep.subr.mxu0 0.0
        %269 = vmatpush2.msra.mxu0 0.0
        %270 = vmatprep.subr.mxu0 0.0
        %271 = vmatpush2.msra.mxu0 0.0
        %272 = vmatprep.subr.mxu0 0.0
        %273 = vmatpush2.msra.mxu0 0.0
        %274 = vmatprep.subr.mxu0 0.0
        %275 = vmatpush2.msra.mxu0 0.0
        %276 = vmatprep.subr.mxu0 0.0
        %277 = vmatpush2.msra.mxu0 0.0
        %278 = vmatprep.subr.mxu0 0.0
        %279 = vmatpush2.msra.mxu0 0.0
        %280 = vmatprep.subr.mxu0 0.0
        %281 = vmatpush2.msra.mxu0 0.0
        %282 = vmatprep.subr.mxu0 0.0
        %283 = vmatpush2.msra.mxu0 0.0
        %284 = vmatprep.subr.mxu0 0.0
        %285 = vmatpush2.msra.mxu0 0.0
        %286 = vmatprep.subr.mxu0 0.0
        %287 = vmatpush2.msra.mxu0 0.0
        %288 = vmatprep.subr.mxu0 0.0
        %289 = vmatpush2.msra.mxu0 0.0
        %290 = vmatprep.subr.mxu0 0.0
        %291 = vmatpush2.msra.mxu0 0.0
        %292 = vmatprep.subr.mxu0 0.0
        %293 = vmatpush2.msra.mxu0 0.0
        %294 = vmatprep.subr.mxu0 0.0
        %295 = vmatpush2.msra.mxu0 0.0
        %296 = vmatprep.subr.mxu0 0.0
        %297 = vmatpush2.msra.mxu0 0.0
        %298 = vmatprep.subr.mxu0 0.0
        %299 = vmatpush2.msra.mxu0 0.0
        %300 = vmatprep.mubr.f32.mxu0 0.0
        %301 = vmatmul.mubr.f32.gmra.mxu0 %v234
        %v302 = vpop.f32.mrf.mxu0
        %v303 = vadd.f32 %v230, %v302
        %v304 = vpop.f32.mrf.mxu0
        %305 = vdwg.mxu0
        %v306 = vmul.f32 %v303, 0.5
        %v307 = vmul.f32 %v303, 0.70710677
        %v308 = verf.f32.pop %v307
        %v309 = vadd.f32 %v308, 1.0
        %v310 = vmul.f32 %v306, %v309
        %v311 = vld [vmem:[%s3] sm:$0xff]
        %v312 = vld [vmem:[%s3 + $0x8] sm:$0xff]
        %v313 = vld [vmem:[%s3 + $0x10] sm:$0xff]
        %v314 = vld [vmem:[%s3 + $0x18] sm:$0xff]
        %v315 = vld [vmem:[%s3 + $0x20] sm:$0xff]
        %v316 = vld [vmem:[%s3 + $0x28] sm:$0xff]
        %v317 = vld [vmem:[%s3 + $0x30] sm:$0xff]
        %v318 = vld [vmem:[%s3 + $0x38] sm:$0xff]
        %v319 = vld [vmem:[%s3 + $0x40] sm:$0xff]
        %v320 = vld [vmem:[%s3 + $0x48] sm:$0xff]
        %v321 = vld [vmem:[%s3 + $0x50] sm:$0xff]
        %v322 = vld [vmem:[%s3 + $0x58] sm:$0xff]
        %v323 = vld [vmem:[%s3 + $0x60] sm:$0xff]
        %v324 = vld [vmem:[%s3 + $0x68] sm:$0xff]
        %v325 = vld [vmem:[%s3 + $0x70] sm:$0xff]
        %v326 = vld [vmem:[%s3 + $0x78] sm:$0xff]
        %v327 = vld [vmem:[%s4] sm:$0x1]
        %v329 = vlaneseq
        %v330 = vshrl.u32 %v329, 7
        %v331 = vsub.s32 0, %v330
        %v332 = vrot.slane %v327, %v331
        %334 = vmatprep.subr.mxu0 0.0
        %335 = vmatpush1.msra.mxu0 %v326
        %336 = vmatprep.subr.mxu0 0.0
        %337 = vmatpush1.msra.mxu0 %v325
        %338 = vmatprep.subr.mxu0 0.0
        %339 = vmatpush1.msra.mxu0 %v324
        %340 = vmatprep.subr.mxu0 0.0
        %341 = vmatpush1.msra.mxu0 %v323
        %342 = vmatprep.subr.mxu0 0.0
        %343 = vmatpush1.msra.mxu0 %v322
        %344 = vmatprep.subr.mxu0 0.0
        %345 = vmatpush1.msra.mxu0 %v321
        %346 = vmatprep.subr.mxu0 0.0
        %347 = vmatpush1.msra.mxu0 %v320
        %348 = vmatprep.subr.mxu0 0.0
        %349 = vmatpush1.msra.mxu0 %v319
        %350 = vmatprep.subr.mxu0 0.0
        %351 = vmatpush1.msra.mxu0 %v318
        %352 = vmatprep.subr.mxu0 0.0
        %353 = vmatpush1.msra.mxu0 %v317
        %354 = vmatprep.subr.mxu0 0.0
        %355 = vmatpush1.msra.mxu0 %v316
        %356 = vmatprep.subr.mxu0 0.0
        %357 = vmatpush1.msra.mxu0 %v315
        %358 = vmatprep.subr.mxu0 0.0
        %359 = vmatpush1.msra.mxu0 %v314
        %360 = vmatprep.subr.mxu0 0.0
        %361 = vmatpush1.msra.mxu0 %v313
        %362 = vmatprep.subr.mxu0 0.0
        %363 = vmatpush1.msra.mxu0 %v312
        %364 = vmatprep.subr.mxu0 0.0
        %365 = vmatpush1.msra.mxu0 %v311
        %366 = vmatprep.subr.mxu0 0.0
        %367 = vmatpush2.msra.mxu0 0.0
        %368 = vmatprep.subr.mxu0 0.0
        %369 = vmatpush2.msra.mxu0 0.0
        %370 = vmatprep.subr.mxu0 0.0
        %371 = vmatpush2.msra.mxu0 0.0
        %372 = vmatprep.subr.mxu0 0.0
        %373 = vmatpush2.msra.mxu0 0.0
        %374 = vmatprep.subr.mxu0 0.0
        %375 = vmatpush2.msra.mxu0 0.0
        %376 = vmatprep.subr.mxu0 0.0
        %377 = vmatpush2.msra.mxu0 0.0
        %378 = vmatprep.subr.mxu0 0.0
        %379 = vmatpush2.msra.mxu0 0.0
        %380 = vmatprep.subr.mxu0 0.0
        %381 = vmatpush2.msra.mxu0 0.0
        %382 = vmatprep.subr.mxu0 0.0
        %383 = vmatpush2.msra.mxu0 0.0
        %384 = vmatprep.subr.mxu0 0.0
        %385 = vmatpush2.msra.mxu0 0.0
        %386 = vmatprep.subr.mxu0 0.0
        %387 = vmatpush2.msra.mxu0 0.0
        %388 = vmatprep.subr.mxu0 0.0
        %389 = vmatpush2.msra.mxu0 0.0
        %390 = vmatprep.subr.mxu0 0.0
        %391 = vmatpush2.msra.mxu0 0.0
        %392 = vmatprep.subr.mxu0 0.0
        %393 = vmatpush2.msra.mxu0 0.0
        %394 = vmatprep.subr.mxu0 0.0
        %395 = vmatpush2.msra.mxu0 0.0
        %396 = vmatprep.subr.mxu0 0.0
        %397 = vmatpush2.msra.mxu0 0.0
        %398 = vmatprep.mubr.f32.mxu0 0.0
        %399 = vmatmul.mubr.f32.gmra.mxu0 %v310
        %v400 = vpop.f32.mrf.mxu0
        %v401 = vadd.f32 %v332, %v400
        %v402 = vpop.f32.mrf.mxu0
        %403 = vdwg.mxu0
        %404 = vst.msk [vmem:[%s215] sm:$0xff] %vm232, %v401
        %s405 = sand.u32 %s137, 1
        %s406 = scalar_lea.sflag [#allocation3], %s405
        %s407 = sand.u32 %s137, 1
        %s408 = smul.addr %s407, 8
        %s409 = scalar_lea.vmem [#allocation2], %s408
        // Predicated region
        $region41: #{tpu_custom_call.1} parent=39 // pred_check
          %p410 = pneg %p147
        $region42: #{tpu_custom_call.1} parent=39 // pred_check_branch
          %412 = sbr.rel (%p410) target = $region44
        $region43: #{tpu_custom_call.1} parent=39 // pred_region
          %s414 = ssub.s32 128, 128
          %415 = vsyncadd %s406, %s414
          %s416 = smul.addr %s19, 128
          %s417 = scalar_lea.hbm %s5, %s416
          %s419 = sshll.u32 %s409, 4
          %s420 = int_to_ptr.vmem [resolvable:$true] %s419
          %422 = dma.vmem_to_hbm [thread:$0]  %s420, 128, %s417, %s406
        $region44: #{tpu_custom_call.1} parent=39 // pred_fallthru
          _
      $region40: #{tpu_custom_call.1} parent=5 // pred_fallthru
        _
      %p423 = scmp.le.s32.totalorder 2, %s14
      // Predicated region
      $region45: #{tpu_custom_call.1} parent=5 // pred_check
        %p424 = pneg %p423
      $region46: #{tpu_custom_call.1} parent=5 // pred_check_branch
        %426 = sbr.rel (%p424) target = $region48
      $region47: #{tpu_custom_call.1} parent=5 // pred_region
        %s427 = ssub.s32 %s14, 2
        // Predicated region
        $region49: #{tpu_custom_call.1} parent=47 // pred_check
          %p428 = pneg %p153
        $region50: #{tpu_custom_call.1} parent=47 // pred_check_branch
          %430 = sbr.rel (%p428) target = $region52
        $region51: #{tpu_custom_call.1} parent=47 // pred_region
          %s431 = sand.u32 %s138, 1
          %s432 = scalar_lea.sflag [#allocation3], %s431
          %s433 = sand.u32 %s138, 1
          %s434 = smul.addr %s433, 8
          %s435 = scalar_lea.vmem [#allocation2], %s434
          %436 = dma.done %s432, 128
        $region52: #{tpu_custom_call.1} parent=47 // pred_fallthru
          _
      $region48: #{tpu_custom_call.1} parent=5 // pred_fallthru
        _
    $region6: #{tpu_custom_call.1} parent=1 // loop_footer
      %s18 = sadd.s32 1, %s14
    $region7: #{tpu_custom_call.1} parent=1 // loop_footer_branch
      %13 = sbr.rel target = $region3
    $region8: #{tpu_custom_call.1} parent=1 // loop_exit
      _
    %437 = vsyncpa [#allocation3], 1
    %s438 = scalar_lea.sflag [#allocation3], 1
    %439 = vsyncpa %s438, 1

</llo_original>
